<compile_context>
chip_gen: v5e
topology: v5e:2x2
jax: 0.10.0
libtpu: 0.0.40
codegen_flags: <defaults>
</compile_context>

<pallas_src>
import functools

import jax
import jax.numpy as jnp
from jax.experimental import pallas as pl
from jax.experimental.pallas import tpu as pltpu

_KERNEL = 3
_STRIDE = 2
_TARGET_BLOCK_BYTES = 4 * 1024 * 1024  # target size of one (double-buffered) input block


def _maxpool_kernel(x_ref, o_ref, *, ho, wo):
    # x_ref block: (2, 2, ho+1, wo+1, tc)   phases (a, b): row = 2r + a, col = 2c + b
    # o_ref block: (ho, wo, tc)             lane dim = channels (lane-dense store)
    #
    # Output pixel (i, j) pools rows {2i, 2i+1, 2i+2} and cols {2j, 2j+1, 2j+2}:
    #   rows -> (a=0, r=i), (a=1, r=i), (a=0, r=i+1)   (same for cols)
    combos = ((0, 0), (1, 0), (0, 1))  # (phase, slice offset)
    acc = None
    for a, rs in combos:
        for b, cs in combos:
            win = x_ref[a, b, pl.ds(rs, ho), pl.ds(cs, wo), :]  # unit-stride slices
            acc = win if acc is None else jnp.maximum(acc, win)
    o_ref[...] = acc  # single full-width store


def _padded_block_bytes(block_shape, dtype):
    """VMEM footprint of one block after (sublane, 128)-tile padding."""
    itemsize = jnp.dtype(dtype).itemsize
    sub_tile = 8 * max(1, 4 // itemsize)  # 8 for f32, 16 for bf16, 32 for int8
    *lead, sub, lane = block_shape
    sub_p = -(-sub // sub_tile) * sub_tile
    lane_p = -(-lane // 128) * 128
    lead_prod = 1
    for d in lead:
        lead_prod *= d
    return lead_prod * sub_p * lane_p * itemsize


def maxpool_branch(x):
    """Equivalent of MaxPoolBranch.forward: 3x3 max pool, stride 2, pad 0, ceil_mode=True."""
    n, c, h, w = x.shape

    # ceil_mode output sizes + PyTorch rule: last window must start inside the input
    ho = -(-(h - _KERNEL) // _STRIDE) + 1
    wo = -(-(w - _KERNEL) // _STRIDE) + 1
    if (ho - 1) * _STRIDE >= h:
        ho -= 1
    if (wo - 1) * _STRIDE >= w:
        wo -= 1

    nc = n * c
    # dtype-aware "minus infinity" pad value (guards integer dtypes too)
    if jnp.issubdtype(x.dtype, jnp.floating):
        pad_val = jnp.finfo(x.dtype).min
    else:
        pad_val = jnp.iinfo(x.dtype).min

    # --- choose lane-tile tc (channels per grid step) ---------------------
    itemsize = jnp.dtype(x.dtype).itemsize
    plane_bytes = _STRIDE * _STRIDE * (ho + 1) * (wo + 1) * itemsize  # bytes per lane
    tc = max(1, _TARGET_BLOCK_BYTES // plane_bytes)
    if tc >= nc or nc <= 128:
        tc = nc                              # lane dim == full array dim (always legal)
    else:
        tc = max(128, (tc // 128) * 128)     # lane dim multiple of 128
    ncp = -(-nc // tc) * tc                  # pad channel axis to a multiple of tc
    # v7x megacore: prefer >= 2 grid steps when we can split without extra padding
    if ncp // tc < 2:
        half = (ncp // 2 // 128) * 128
        if half >= 128 and -(-nc // half) * half <= ncp:
            tc = half
            ncp = -(-nc // tc) * tc

    # --- single fused relayout: pad + phase split + channels-last ---------
    hp = _STRIDE * (ho + 1)
    wp = _STRIDE * (wo + 1)
    xf = x.reshape(nc, h, w)
    xf = jnp.pad(
        xf, ((0, ncp - nc), (0, hp - h), (0, wp - w)), constant_values=pad_val
    )
    # (ncp, hp, wp) -> (ncp, ho+1, 2, wo+1, 2) -> (2, 2, ho+1, wo+1, ncp)
    xf = xf.reshape(ncp, ho + 1, _STRIDE, wo + 1, _STRIDE).transpose(2, 4, 1, 3, 0)

    in_block = (_STRIDE, _STRIDE, ho + 1, wo + 1, tc)
    out_block = (ho, wo, tc)
    vmem_budget = 2 * (
        _padded_block_bytes(in_block, x.dtype) + _padded_block_bytes(out_block, x.dtype)
    )
    vmem_limit = int(
        min(64 * 1024 * 1024,
            max(16 * 1024 * 1024, vmem_budget * 5 // 4 + 2 * 1024 * 1024))
    )

    kernel = functools.partial(_maxpool_kernel, ho=ho, wo=wo)
    out = pl.pallas_call(
        kernel,
        out_shape=jax.ShapeDtypeStruct((ho, wo, ncp), x.dtype),
        grid=(ncp // tc,),
        in_specs=[pl.BlockSpec(in_block, lambda i: (0, 0, 0, 0, i))],
        out_specs=pl.BlockSpec(out_block, lambda i: (0, 0, i)),
        compiler_params=pltpu.CompilerParams(
            dimension_semantics=("parallel",),
            vmem_limit_bytes=vmem_limit,
        ),
    )(xf)

    # back to NCHW for PyTorch parity (drop junk lanes, then transpose)
    out = out[:, :, :nc]
    return jnp.moveaxis(out, -1, 0).reshape(n, c, ho, wo)


if __name__ == "__main__":
    key = jax.random.PRNGKey(0)
    x = jax.random.normal(key, (2, 4, 16, 16), dtype=jnp.float32)

    pool = jax.jit(maxpool_branch)
    y = jax.block_until_ready(pool(x))

    # pure-JAX reference: pad with -inf to the ceil_mode extent, then VALID reduce_window
    ho, wo = y.shape[2], y.shape[3]
    ph = (ho - 1) * _STRIDE + _KERNEL - x.shape[2]
    pw = (wo - 1) * _STRIDE + _KERNEL - x.shape[3]
    neg = jnp.finfo(x.dtype).min
    xref = jnp.pad(x, ((0, 0), (0, 0), (0, ph), (0, pw)), constant_values=neg)
    ref = jax.lax.reduce_window(
        xref, -jnp.inf, jax.lax.max,
        window_dimensions=(1, 1, _KERNEL, _KERNEL),
        window_strides=(1, 1, _STRIDE, _STRIDE),
        padding="VALID",
    )

    assert y.shape == (2, 4, 8, 8), y.shape
    assert y.dtype == x.dtype
    assert jnp.allclose(y, ref), "Pallas maxpool mismatch vs reference"
    print("KERNEL_OK")
</pallas_src>

<mosaic_0001>
module attributes {stable_mosaic.version = 11 : i64} {
  func.func @_maxpool_kernel(%arg0: i32, %arg1: memref<2x2x9x9x8xf32, #tpu.memory_space<vmem>>, %arg2: memref<8x8x8xf32, #tpu.memory_space<vmem>>) attributes {dimension_semantics = [#tpu.dimension_semantics<parallel>], iteration_bounds = array<i64: 1>, scalar_prefetch = 0 : i64, scratch_operands = 0 : i64, tpu.core_type = #tpu.core_type<tc>, window_params = [{transform_indices = @transform_0, window_bounds = array<i64: 2, 2, 9, 9, 8>}, {transform_indices = @transform_1, window_bounds = array<i64: 8, 8, 8>}]} {
    %c0 = arith.constant 0 : index
    %c0_0 = arith.constant 0 : index
    %c0_1 = arith.constant 0 : index
    %c0_2 = arith.constant 0 : index
    %c0_3 = arith.constant 0 : index
    %0 = vector.load %arg1[%c0, %c0_0, %c0_1, %c0_2, %c0_3] : memref<2x2x9x9x8xf32, #tpu.memory_space<vmem>>, vector<1x1x8x8x8xf32>
    %1 = vector.shape_cast %0 : vector<1x1x8x8x8xf32> to vector<8x8x8xf32>
    %c0_4 = arith.constant 0 : index
    %c1 = arith.constant 1 : index
    %c0_5 = arith.constant 0 : index
    %c0_6 = arith.constant 0 : index
    %c0_7 = arith.constant 0 : index
    %2 = vector.load %arg1[%c0_4, %c1, %c0_5, %c0_6, %c0_7] : memref<2x2x9x9x8xf32, #tpu.memory_space<vmem>>, vector<1x1x8x8x8xf32>
    %3 = vector.shape_cast %2 : vector<1x1x8x8x8xf32> to vector<8x8x8xf32>
    %4 = arith.maximumf %1, %3 : vector<8x8x8xf32>
    %c0_8 = arith.constant 0 : index
    %c0_9 = arith.constant 0 : index
    %c0_10 = arith.constant 0 : index
    %c1_11 = arith.constant 1 : index
    %c0_12 = arith.constant 0 : index
    %5 = vector.load %arg1[%c0_8, %c0_9, %c0_10, %c1_11, %c0_12] : memref<2x2x9x9x8xf32, #tpu.memory_space<vmem>>, vector<1x1x8x8x8xf32>
    %6 = vector.shape_cast %5 : vector<1x1x8x8x8xf32> to vector<8x8x8xf32>
    %7 = arith.maximumf %4, %6 : vector<8x8x8xf32>
    %c1_13 = arith.constant 1 : index
    %c0_14 = arith.constant 0 : index
    %c0_15 = arith.constant 0 : index
    %c0_16 = arith.constant 0 : index
    %c0_17 = arith.constant 0 : index
    %8 = vector.load %arg1[%c1_13, %c0_14, %c0_15, %c0_16, %c0_17] : memref<2x2x9x9x8xf32, #tpu.memory_space<vmem>>, vector<1x1x8x8x8xf32>
    %9 = vector.shape_cast %8 : vector<1x1x8x8x8xf32> to vector<8x8x8xf32>
    %10 = arith.maximumf %7, %9 : vector<8x8x8xf32>
    %c1_18 = arith.constant 1 : index
    %c1_19 = arith.constant 1 : index
    %c0_20 = arith.constant 0 : index
    %c0_21 = arith.constant 0 : index
    %c0_22 = arith.constant 0 : index
    %11 = vector.load %arg1[%c1_18, %c1_19, %c0_20, %c0_21, %c0_22] : memref<2x2x9x9x8xf32, #tpu.memory_space<vmem>>, vector<1x1x8x8x8xf32>
    %12 = vector.shape_cast %11 : vector<1x1x8x8x8xf32> to vector<8x8x8xf32>
    %13 = arith.maximumf %10, %12 : vector<8x8x8xf32>
    %c1_23 = arith.constant 1 : index
    %c0_24 = arith.constant 0 : index
    %c0_25 = arith.constant 0 : index
    %c1_26 = arith.constant 1 : index
    %c0_27 = arith.constant 0 : index
    %14 = vector.load %arg1[%c1_23, %c0_24, %c0_25, %c1_26, %c0_27] : memref<2x2x9x9x8xf32, #tpu.memory_space<vmem>>, vector<1x1x8x8x8xf32>
    %15 = vector.shape_cast %14 : vector<1x1x8x8x8xf32> to vector<8x8x8xf32>
    %16 = arith.maximumf %13, %15 : vector<8x8x8xf32>
    %c0_28 = arith.constant 0 : index
    %c0_29 = arith.constant 0 : index
    %c1_30 = arith.constant 1 : index
    %c0_31 = arith.constant 0 : index
    %c0_32 = arith.constant 0 : index
    %17 = vector.load %arg1[%c0_28, %c0_29, %c1_30, %c0_31, %c0_32] : memref<2x2x9x9x8xf32, #tpu.memory_space<vmem>>, vector<1x1x8x8x8xf32>
    %18 = vector.shape_cast %17 : vector<1x1x8x8x8xf32> to vector<8x8x8xf32>
    %19 = arith.maximumf %16, %18 : vector<8x8x8xf32>
    %c0_33 = arith.constant 0 : index
    %c1_34 = arith.constant 1 : index
    %c1_35 = arith.constant 1 : index
    %c0_36 = arith.constant 0 : index
    %c0_37 = arith.constant 0 : index
    %20 = vector.load %arg1[%c0_33, %c1_34, %c1_35, %c0_36, %c0_37] : memref<2x2x9x9x8xf32, #tpu.memory_space<vmem>>, vector<1x1x8x8x8xf32>
    %21 = vector.shape_cast %20 : vector<1x1x8x8x8xf32> to vector<8x8x8xf32>
    %22 = arith.maximumf %19, %21 : vector<8x8x8xf32>
    %c0_38 = arith.constant 0 : index
    %c0_39 = arith.constant 0 : index
    %c1_40 = arith.constant 1 : index
    %c1_41 = arith.constant 1 : index
    %c0_42 = arith.constant 0 : index
    %23 = vector.load %arg1[%c0_38, %c0_39, %c1_40, %c1_41, %c0_42] : memref<2x2x9x9x8xf32, #tpu.memory_space<vmem>>, vector<1x1x8x8x8xf32>
    %24 = vector.shape_cast %23 : vector<1x1x8x8x8xf32> to vector<8x8x8xf32>
    %25 = arith.maximumf %22, %24 : vector<8x8x8xf32>
    %c0_43 = arith.constant 0 : index
    %c0_44 = arith.constant 0 : index
    %c0_45 = arith.constant 0 : index
    %26 = vector.load %arg2[%c0_43, %c0_44, %c0_45] : memref<8x8x8xf32, #tpu.memory_space<vmem>>, vector<8x8x8xf32>
    tpu.vector_store %arg2[%c0_43, %c0_44, %c0_45], %25 {strides = array<i32>} : memref<8x8x8xf32, #tpu.memory_space<vmem>>, vector<8x8x8xf32>,
    return
  }
  func.func @transform_0(%arg0: i32) -> (i32, i32, i32, i32, i32) {
    %c0_i32 = arith.constant 0 : i32
    %c0_i32_0 = arith.constant 0 : i32
    %c0_i32_1 = arith.constant 0 : i32
    %c0_i32_2 = arith.constant 0 : i32
    %c0_i32_3 = arith.constant 0 : i32
    return %c0_i32, %c0_i32_0, %c0_i32_1, %c0_i32_2, %arg0 : i32, i32, i32, i32, i32
  }
  func.func @transform_1(%arg0: i32) -> (i32, i32, i32) {
    %c0_i32 = arith.constant 0 : i32
    %c0_i32_0 = arith.constant 0 : i32
    %c0_i32_1 = arith.constant 0 : i32
    return %c0_i32, %c0_i32_0, %arg0 : i32, i32, i32
  }
}

</mosaic_0001>

<llo_original>
// kernel: maxpool_branch.1
$region0: #{maxpool_branch.1}
  #allocation0 [shape = 'u32[]', space=smem, size = 0x4, offset = 0x4, fixed_abs, tag = 'smem constant byte address 0x4 - core index']
  #allocation1 [shape = 'u32[72,128]{1,0:T(1,128)}', space=vmem, size = 0x9000, scoped, tag = 'internal scratch']
  %s0 = inlined_call_operand.vmem [shape: f32[2,2,9,9,8], index: 0, kind: input, shape index: {}]
  %s1 = inlined_call_operand.vmem [shape: f32[8,8,8], index: 1, kind: output, shape index: {}]
  %s2 = sld [smem:[#allocation0]]
  $region14: #{maxpool_branch.1} parent=0
    _
  %s4 = ssub.s32 1, %s2
  %s5 = scalar_select 0, %s4, %s2
  // Predicated region
  $region2: #{maxpool_branch.1} parent=0 // pred_check
    _
  $region3: #{maxpool_branch.1} parent=0 // pred_check_branch
    %7 = sbr.rel (0) target = $region5
  $region4: #{maxpool_branch.1} parent=0 // pred_region
    _
  $region5: #{maxpool_branch.1} parent=0 // pred_fallthru
    _
  %v8 = vld [vmem:[%s0] sm:$0xff]
  %v9 = vld [vmem:[%s0 + $0x10] sm:$0xff]
  %v10 = vld [vmem:[%s0 + $0x20] sm:$0xff]
  %v11 = vld [vmem:[%s0 + $0x30] sm:$0xff]
  %v12 = vld [vmem:[%s0 + $0x40] sm:$0xff]
  %v13 = vld [vmem:[%s0 + $0x50] sm:$0xff]
  %v14 = vld [vmem:[%s0 + $0x60] sm:$0xff]
  %v15 = vld [vmem:[%s0 + $0x70] sm:$0xff]
  %s16 = scalar_lea.vmem %s0, 144
  %v17 = vld [vmem:[%s16] sm:$0xff]
  %v18 = vld [vmem:[%s16 + $0x10] sm:$0xff]
  %v19 = vld [vmem:[%s16 + $0x20] sm:$0xff]
  %v20 = vld [vmem:[%s16 + $0x30] sm:$0xff]
  %v21 = vld [vmem:[%s16 + $0x40] sm:$0xff]
  %v22 = vld [vmem:[%s16 + $0x50] sm:$0xff]
  %v23 = vld [vmem:[%s16 + $0x60] sm:$0xff]
  %v24 = vld [vmem:[%s16 + $0x70] sm:$0xff]
  %v25 = vmax.f32 %v8, %v17
  %v26 = vmax.f32 %v9, %v18
  %v27 = vmax.f32 %v10, %v19
  %v28 = vmax.f32 %v11, %v20
  %v29 = vmax.f32 %v12, %v21
  %v30 = vmax.f32 %v13, %v22
  %v31 = vmax.f32 %v14, %v23
  %v32 = vmax.f32 %v15, %v24
  %v33 = vld [vmem:[%s0 + $0x1] sm:$0xff]
  %v34 = vld [vmem:[%s0 + $0x11] sm:$0xff]
  %v35 = vld [vmem:[%s0 + $0x21] sm:$0xff]
  %v36 = vld [vmem:[%s0 + $0x31] sm:$0xff]
  %v37 = vld [vmem:[%s0 + $0x41] sm:$0xff]
  %v38 = vld [vmem:[%s0 + $0x51] sm:$0xff]
  %v39 = vld [vmem:[%s0 + $0x61] sm:$0xff]
  %v40 = vld [vmem:[%s0 + $0x71] sm:$0xff]
  %v41 = vmax.f32 %v25, %v33
  %v42 = vmax.f32 %v26, %v34
  %v43 = vmax.f32 %v27, %v35
  %v44 = vmax.f32 %v28, %v36
  %v45 = vmax.f32 %v29, %v37
  %v46 = vmax.f32 %v30, %v38
  %v47 = vmax.f32 %v31, %v39
  %v48 = vmax.f32 %v32, %v40
  %s49 = scalar_lea.vmem %s0, 288
  %v50 = vld [vmem:[%s49] sm:$0xff]
  %v51 = vld [vmem:[%s49 + $0x10] sm:$0xff]
  %v52 = vld [vmem:[%s49 + $0x20] sm:$0xff]
  %v53 = vld [vmem:[%s49 + $0x30] sm:$0xff]
  %v54 = vld [vmem:[%s49 + $0x40] sm:$0xff]
  %v55 = vld [vmem:[%s49 + $0x50] sm:$0xff]
  %v56 = vld [vmem:[%s49 + $0x60] sm:$0xff]
  %v57 = vld [vmem:[%s49 + $0x70] sm:$0xff]
  %v58 = vmax.f32 %v41, %v50
  %v59 = vmax.f32 %v42, %v51
  %v60 = vmax.f32 %v43, %v52
  %v61 = vmax.f32 %v44, %v53
  %v62 = vmax.f32 %v45, %v54
  %v63 = vmax.f32 %v46, %v55
  %v64 = vmax.f32 %v47, %v56
  %v65 = vmax.f32 %v48, %v57
  %s66 = scalar_lea.vmem %s0, 432
  %v67 = vld [vmem:[%s66] sm:$0xff]
  %v68 = vld [vmem:[%s66 + $0x10] sm:$0xff]
  %v69 = vld [vmem:[%s66 + $0x20] sm:$0xff]
  %v70 = vld [vmem:[%s66 + $0x30] sm:$0xff]
  %v71 = vld [vmem:[%s66 + $0x40] sm:$0xff]
  %v72 = vld [vmem:[%s66 + $0x50] sm:$0xff]
  %v73 = vld [vmem:[%s66 + $0x60] sm:$0xff]
  %v74 = vld [vmem:[%s66 + $0x70] sm:$0xff]
  %v75 = vmax.f32 %v58, %v67
  %v76 = vmax.f32 %v59, %v68
  %v77 = vmax.f32 %v60, %v69
  %v78 = vmax.f32 %v61, %v70
  %v79 = vmax.f32 %v62, %v71
  %v80 = vmax.f32 %v63, %v72
  %v81 = vmax.f32 %v64, %v73
  %v82 = vmax.f32 %v65, %v74
  %v83 = vld [vmem:[%s49 + $0x1] sm:$0xff]
  %v84 = vld [vmem:[%s49 + $0x11] sm:$0xff]
  %v85 = vld [vmem:[%s49 + $0x21] sm:$0xff]
  %v86 = vld [vmem:[%s49 + $0x31] sm:$0xff]
  %v87 = vld [vmem:[%s49 + $0x41] sm:$0xff]
  %v88 = vld [vmem:[%s49 + $0x51] sm:$0xff]
  %v89 = vld [vmem:[%s49 + $0x61] sm:$0xff]
  %v90 = vld [vmem:[%s49 + $0x71] sm:$0xff]
  %v91 = vmax.f32 %v75, %v83
  %v92 = vmax.f32 %v76, %v84
  %v93 = vmax.f32 %v77, %v85
  %v94 = vmax.f32 %v78, %v86
  %v95 = vmax.f32 %v79, %v87
  %v96 = vmax.f32 %v80, %v88
  %v97 = vmax.f32 %v81, %v89
  %v98 = vmax.f32 %v82, %v90
  %s99 = scalar_lea.vmem %s0, 16
  %v100 = vld [vmem:[%s99] sm:$0xff]
  %v101 = vld [vmem:[%s99 + $0x10] sm:$0xff]
  %v102 = vld [vmem:[%s99 + $0x20] sm:$0xff]
  %v103 = vld [vmem:[%s99 + $0x30] sm:$0xff]
  %v104 = vld [vmem:[%s99 + $0x40] sm:$0xff]
  %v105 = vld [vmem:[%s99 + $0x50] sm:$0xff]
  %v106 = vld [vmem:[%s99 + $0x60] sm:$0xff]
  %v107 = vld [vmem:[%s99 + $0x70] sm:$0xff]
  %v108 = vmax.f32 %v91, %v100
  %v109 = vmax.f32 %v92, %v101
  %v110 = vmax.f32 %v93, %v102
  %v111 = vmax.f32 %v94, %v103
  %v112 = vmax.f32 %v95, %v104
  %v113 = vmax.f32 %v96, %v105
  %v114 = vmax.f32 %v97, %v106
  %v115 = vmax.f32 %v98, %v107
  %s116 = scalar_lea.vmem %s0, 160
  %v117 = vld [vmem:[%s116] sm:$0xff]
  %v118 = vld [vmem:[%s116 + $0x10] sm:$0xff]
  %v119 = vld [vmem:[%s116 + $0x20] sm:$0xff]
  %v120 = vld [vmem:[%s116 + $0x30] sm:$0xff]
  %v121 = vld [vmem:[%s116 + $0x40] sm:$0xff]
  %v122 = vld [vmem:[%s116 + $0x50] sm:$0xff]
  %v123 = vld [vmem:[%s116 + $0x60] sm:$0xff]
  %v124 = vld [vmem:[%s116 + $0x70] sm:$0xff]
  %v125 = vmax.f32 %v108, %v117
  %v126 = vmax.f32 %v109, %v118
  %v127 = vmax.f32 %v110, %v119
  %v128 = vmax.f32 %v111, %v120
  %v129 = vmax.f32 %v112, %v121
  %v130 = vmax.f32 %v113, %v122
  %v131 = vmax.f32 %v114, %v123
  %v132 = vmax.f32 %v115, %v124
  %v133 = vld [vmem:[%s99 + $0x1] sm:$0xff]
  %v134 = vld [vmem:[%s99 + $0x11] sm:$0xff]
  %v135 = vld [vmem:[%s99 + $0x21] sm:$0xff]
  %v136 = vld [vmem:[%s99 + $0x31] sm:$0xff]
  %v137 = vld [vmem:[%s99 + $0x41] sm:$0xff]
  %v138 = vld [vmem:[%s99 + $0x51] sm:$0xff]
  %v139 = vld [vmem:[%s99 + $0x61] sm:$0xff]
  %v140 = vld [vmem:[%s99 + $0x71] sm:$0xff]
  %v141 = vmax.f32 %v125, %v133
  %v142 = vmax.f32 %v126, %v134
  %v143 = vmax.f32 %v127, %v135
  %v144 = vmax.f32 %v128, %v136
  %v145 = vmax.f32 %v129, %v137
  %v146 = vmax.f32 %v130, %v138
  %v147 = vmax.f32 %v131, %v139
  %v148 = vmax.f32 %v132, %v140
  %vm149 = vcmask 64512
  %150 = vst.msk [vmem:[%s1] sm:$0xff] %vm149, %v141
  %151 = vst.msk [vmem:[%s1 + $0x8] sm:$0xff] %vm149, %v142
  %152 = vst.msk [vmem:[%s1 + $0x10] sm:$0xff] %vm149, %v143
  %153 = vst.msk [vmem:[%s1 + $0x18] sm:$0xff] %vm149, %v144
  %154 = vst.msk [vmem:[%s1 + $0x20] sm:$0xff] %vm149, %v145
  %155 = vst.msk [vmem:[%s1 + $0x28] sm:$0xff] %vm149, %v146
  %156 = vst.msk [vmem:[%s1 + $0x30] sm:$0xff] %vm149, %v147
  %157 = vst.msk [vmem:[%s1 + $0x38] sm:$0xff] %vm149, %v148
  // Predicated region
  $region6: #{maxpool_branch.1} parent=0 // pred_check
    _
  $region7: #{maxpool_branch.1} parent=0 // pred_check_branch
    %159 = sbr.rel (0) target = $region9
  $region8: #{maxpool_branch.1} parent=0 // pred_region
    _
  $region9: #{maxpool_branch.1} parent=0 // pred_fallthru
    _
  // Predicated region
  $region10: #{maxpool_branch.1} parent=0 // pred_check
    _
  $region11: #{maxpool_branch.1} parent=0 // pred_check_branch
    %161 = sbr.rel (0) target = $region13
  $region12: #{maxpool_branch.1} parent=0 // pred_region
    _
  $region13: #{maxpool_branch.1} parent=0 // pred_fallthru
    _

</llo_original>
